<compile_context>
chip_gen: v6e
topology: v6e:2x2x1
jax: 0.10.0
libtpu: 0.0.40
codegen_flags: <defaults>
</compile_context>

<pallas_src>
import functools

import jax
import jax.numpy as jnp
from jax.experimental import pallas as pl
from jax.experimental.pallas import tpu as pltpu


def _mlp_kernel(x_ref,
                w1_ref,
                w2_ref, b2_ref,
                w3_ref, b3_ref,
                w4_ref, b4_ref,
                o_ref,
                *, ew_dtype):
    mm = jnp.bfloat16

    x = x_ref[...]                                                  # (4, TB) bf16, last row = 1s

    # fused linear_0 + linear_1 (host-folded), bias folded via the ones row
    y = jnp.dot(w1_ref[...], x, preferred_element_type=jnp.float32)  # (64, TB) f32
    y = jnp.maximum(y.astype(ew_dtype), 0)                           # ReLU (bf16 on v6e/v7x)

    # linear_2 + ReLU
    y = jnp.dot(w2_ref[...], y.astype(mm),
                preferred_element_type=jnp.float32)                  # (16, TB) f32
    y = jnp.maximum(y.astype(ew_dtype) + b2_ref[...], 0)

    # linear_3 + ReLU
    y = jnp.dot(w3_ref[...], y.astype(mm),
                preferred_element_type=jnp.float32)                  # (4, TB) f32
    y = jnp.maximum(y.astype(ew_dtype) + b3_ref[...], 0)

    # linear_4 (4 -> 1): VPU broadcast-multiply + sublane reduce (XLU) --
    # keeps the tiny N=1 matmul off the serial MXU push/pop chain.
    z = jnp.sum(y.astype(jnp.float32) * w4_ref[...],
                axis=0, keepdims=True) + b4_ref[...]                 # (1, TB) f32

    # numerically stable sigmoid on the otherwise-idle EUP:
    #   e = exp(-|z|) never overflows; sigmoid(z) = r if z>=0 else e*r
    e = jnp.exp(-jnp.abs(z))
    r = pl.reciprocal(1.0 + e, approx=True)
    o_ref[...] = jnp.where(z >= 0.0, r, e * r).astype(o_ref.dtype)


def _round_up(n, m):
    return ((n + m - 1) // m) * m


def _elementwise_dtype():
    # bf16 VPU exists on v6e/v7x; v5e and older have no bf16 VPU/EUP -> f32.
    kind = jax.devices()[0].device_kind.lower()
    if ("v6" in kind) or ("v7" in kind):
        return jnp.bfloat16
    return jnp.float32


@functools.partial(jax.jit, static_argnames=("block_b",))
def logistic_regression_forward(x, params, *, block_b=8192):
    """x: (B, 3) float32.
    params: torch-layout list [(W (out, in), b (out,)), ...] for the 5 layers."""
    B = x.shape[0]
    (W0, b0), (W1, b1), (W2, b2), (W3, b3), (W4, b4) = params

    ew_dtype = _elementwise_dtype()

    # --- host-side algebraic fold of linear_0 into linear_1 (no activation
    #     between them, so this is exact), plus b1 folded into the matmul via
    #     an appended ones-row on x.
    W01 = W1 @ W0                                            # (64, 3)
    b01 = W1 @ b0 + b1                                       # (64,)
    w1a = jnp.concatenate([W01, b01[:, None]], axis=1).astype(jnp.bfloat16)  # (64, 4)

    # --- tile selection: lane-dense batch axis, tb forced to a multiple of 128
    Bp128 = _round_up(B, 128)
    tb = max(128, min(_round_up(block_b, 128), Bp128))
    # very large batches: ensure >= 4 grid steps so v7x's two TensorCores each
    # get double-buffered tiles (never shrink a tile below 4096 for this).
    if Bp128 >= 4 * 4096 and Bp128 // tb < 4:
        tb = max(4096, _round_up(pl.cdiv(Bp128, 4), 128))
    Bp = _round_up(B, tb)

    # --- batch-on-lane layout: (features+1, Bp) bf16, last row = ones
    xT = x.T.astype(jnp.bfloat16)                            # (3, B)
    xa = jnp.concatenate([xT, jnp.ones((1, B), jnp.bfloat16)], axis=0)
    xa = jnp.pad(xa, ((0, 0), (0, Bp - B)))                  # (4, Bp)

    # bf16 MXU operands; biases in the elementwise dtype; final layer f32.
    w2c = W2.astype(jnp.bfloat16)                            # (16, 64)
    w3c = W3.astype(jnp.bfloat16)                            # (4, 16)
    w4c = W4.reshape(4, 1).astype(jnp.float32)               # (4, 1)
    b2c = b2.reshape(16, 1).astype(ew_dtype)
    b3c = b3.reshape(4, 1).astype(ew_dtype)
    b4c = b4.reshape(1, 1).astype(jnp.float32)

    # weights/biases: full-array blocks, constant index_map -> VMEM resident
    const = lambda a: pl.BlockSpec(a.shape, lambda i: (0, 0))

    out = pl.pallas_call(
        functools.partial(_mlp_kernel, ew_dtype=ew_dtype),
        out_shape=jax.ShapeDtypeStruct((1, Bp), jnp.float32),
        grid=(Bp // tb,),
        in_specs=[
            pl.BlockSpec((4, tb), lambda i: (0, i)),          # x tile: (features+1, TB)
            const(w1a),
            const(w2c), const(b2c),
            const(w3c), const(b3c),
            const(w4c), const(b4c),
        ],
        out_specs=pl.BlockSpec((1, tb), lambda i: (0, i)),    # lane-dense output
        compiler_params=pltpu.CompilerParams(
            dimension_semantics=("parallel",),                # batch tiles across TCs
            vmem_limit_bytes=32 << 20,                        # few-MiB working set
        ),
    )(xa, w1a, w2c, b2c, w3c, b3c, w4c, b4c)

    return out[:, :B].T                                       # (B, 1) float32


def init_params(key):
    """Deterministic init, torch layout: W (out, in), b (out,)."""
    dims = [(3, 32), (32, 64), (64, 16), (16, 4), (4, 1)]
    params = []
    for i, (fan_in, fan_out) in enumerate(dims):
        kw, kb = jax.random.split(jax.random.fold_in(key, i))
        bound = 1.0 / jnp.sqrt(float(fan_in))
        w = jax.random.uniform(kw, (fan_out, fan_in), jnp.float32, -bound, bound)
        b = jax.random.uniform(kb, (fan_out,), jnp.float32, -bound, bound)
        params.append((w, b))
    return params


def reference_forward(x, params):
    (W0, b0), (W1, b1), (W2, b2), (W3, b3), (W4, b4) = params
    y = x @ W0.T + b0
    y = jnp.maximum(y @ W1.T + b1, 0.0)
    y = jnp.maximum(y @ W2.T + b2, 0.0)
    y = jnp.maximum(y @ W3.T + b3, 0.0)
    return jax.nn.sigmoid(y @ W4.T + b4)


if __name__ == "__main__":
    key = jax.random.PRNGKey(0)
    kx, kp = jax.random.split(key)

    B = 16  # small batch demo; input features = 3 as in the module
    x = jax.random.normal(kx, (B, 3), jnp.float32)
    params = init_params(kp)

    out = logistic_regression_forward(x, params)
    out = jax.block_until_ready(out)

    ref = reference_forward(x, params)
    assert out.shape == (B, 1)
    # bf16 MXU operands + approx reciprocal => relaxed tolerance vs f32 reference
    err = float(jnp.max(jnp.abs(out - ref)))
    assert jnp.allclose(out, ref, atol=3e-2, rtol=3e-2), err

    print("KERNEL_OK")
</pallas_src>

<mosaic_0001>
module attributes {stable_mosaic.version = 11 : i64} {
  func.func @_mlp_kernel(%arg0: i32, %arg1: memref<4x128xbf16, #tpu.memory_space<vmem>>, %arg2: memref<64x4xbf16, #tpu.memory_space<vmem>>, %arg3: memref<16x64xbf16, #tpu.memory_space<vmem>>, %arg4: memref<16x1xf32, #tpu.memory_space<vmem>>, %arg5: memref<4x16xbf16, #tpu.memory_space<vmem>>, %arg6: memref<4x1xf32, #tpu.memory_space<vmem>>, %arg7: memref<4x1xf32, #tpu.memory_space<vmem>>, %arg8: memref<1x1xf32, #tpu.memory_space<vmem>>, %arg9: memref<1x128xf32, #tpu.memory_space<vmem>>) attributes {dimension_semantics = [#tpu.dimension_semantics<parallel>], iteration_bounds = array<i64: 1>, scalar_prefetch = 0 : i64, scratch_operands = 0 : i64, tpu.core_type = #tpu.core_type<tc>, window_params = [{transform_indices = @transform_0, window_bounds = array<i64: 4, 128>}, {pipeline_mode = #tpu.pipeline_mode<synchronous>, transform_indices = @transform_1, window_bounds = array<i64: 64, 4>}, {pipeline_mode = #tpu.pipeline_mode<synchronous>, transform_indices = @transform_2, window_bounds = array<i64: 16, 64>}, {pipeline_mode = #tpu.pipeline_mode<synchronous>, transform_indices = @transform_3, window_bounds = array<i64: 16, 1>}, {pipeline_mode = #tpu.pipeline_mode<synchronous>, transform_indices = @transform_4, window_bounds = array<i64: 4, 16>}, {pipeline_mode = #tpu.pipeline_mode<synchronous>, transform_indices = @transform_5, window_bounds = array<i64: 4, 1>}, {pipeline_mode = #tpu.pipeline_mode<synchronous>, transform_indices = @transform_6, window_bounds = array<i64: 4, 1>}, {pipeline_mode = #tpu.pipeline_mode<synchronous>, transform_indices = @transform_7, window_bounds = array<i64: 1, 1>}, {transform_indices = @transform_8, window_bounds = array<i64: 1, 128>}]} {
    %c0 = arith.constant 0 : index
    %c0_0 = arith.constant 0 : index
    %0 = vector.load %arg1[%c0, %c0_0] : memref<4x128xbf16, #tpu.memory_space<vmem>>, vector<4x128xbf16>
    %c0_1 = arith.constant 0 : index
    %c0_2 = arith.constant 0 : index
    %1 = vector.load %arg2[%c0_1, %c0_2] : memref<64x4xbf16, #tpu.memory_space<vmem>>, vector<64x4xbf16>
    %cst = arith.constant dense<0.000000e+00> : vector<64x128xf32>
    %2 = tpu.matmul %1, %0, %cst {dimension_numbers = #tpu.dot_dimension_numbers<[1], [0], [0], [1], [0, 0, 1, 1], [], []>} : vector<64x4xbf16>, vector<4x128xbf16>, vector<64x128xf32> -> vector<64x128xf32>
    %cst_3 = arith.constant 0.000000e+00 : f32
    %3 = vector.broadcast %cst_3 : f32 to vector<64x128xf32>
    %4 = arith.maximumf %2, %3 : vector<64x128xf32>
    %c0_4 = arith.constant 0 : index
    %c0_5 = arith.constant 0 : index
    %5 = vector.load %arg3[%c0_4, %c0_5] : memref<16x64xbf16, #tpu.memory_space<vmem>>, vector<16x64xbf16>
    %6 = arith.truncf %4 : vector<64x128xf32> to vector<64x128xbf16>
    %cst_6 = arith.constant dense<0.000000e+00> : vector<16x128xf32>
    %7 = tpu.matmul %5, %6, %cst_6 {dimension_numbers = #tpu.dot_dimension_numbers<[1], [0], [0], [1], [0, 0, 1, 1], [], []>} : vector<16x64xbf16>, vector<64x128xbf16>, vector<16x128xf32> -> vector<16x128xf32>
    %c0_7 = arith.constant 0 : index
    %c0_8 = arith.constant 0 : index
    %8 = vector.load %arg4[%c0_7, %c0_8] : memref<16x1xf32, #tpu.memory_space<vmem>>, vector<16x1xf32>
    %9 = vector.broadcast %8 : vector<16x1xf32> to vector<16x128xf32>
    %10 = arith.addf %7, %9 : vector<16x128xf32>
    %cst_9 = arith.constant 0.000000e+00 : f32
    %11 = vector.broadcast %cst_9 : f32 to vector<16x128xf32>
    %12 = arith.maximumf %10, %11 : vector<16x128xf32>
    %c0_10 = arith.constant 0 : index
    %c0_11 = arith.constant 0 : index
    %13 = vector.load %arg5[%c0_10, %c0_11] : memref<4x16xbf16, #tpu.memory_space<vmem>>, vector<4x16xbf16>
    %14 = arith.truncf %12 : vector<16x128xf32> to vector<16x128xbf16>
    %cst_12 = arith.constant dense<0.000000e+00> : vector<4x128xf32>
    %15 = tpu.matmul %13, %14, %cst_12 {dimension_numbers = #tpu.dot_dimension_numbers<[1], [0], [0], [1], [0, 0, 1, 1], [], []>} : vector<4x16xbf16>, vector<16x128xbf16>, vector<4x128xf32> -> vector<4x128xf32>
    %c0_13 = arith.constant 0 : index
    %c0_14 = arith.constant 0 : index
    %16 = vector.load %arg6[%c0_13, %c0_14] : memref<4x1xf32, #tpu.memory_space<vmem>>, vector<4x1xf32>
    %17 = vector.broadcast %16 : vector<4x1xf32> to vector<4x128xf32>
    %18 = arith.addf %15, %17 : vector<4x128xf32>
    %cst_15 = arith.constant 0.000000e+00 : f32
    %19 = vector.broadcast %cst_15 : f32 to vector<4x128xf32>
    %20 = arith.maximumf %18, %19 : vector<4x128xf32>
    %c0_16 = arith.constant 0 : index
    %c0_17 = arith.constant 0 : index
    %21 = vector.load %arg7[%c0_16, %c0_17] : memref<4x1xf32, #tpu.memory_space<vmem>>, vector<4x1xf32>
    %22 = vector.broadcast %21 : vector<4x1xf32> to vector<4x128xf32>
    %23 = arith.mulf %20, %22 : vector<4x128xf32>
    %cst_18 = arith.constant dense<0.000000e+00> : vector<128xf32>
    %24 = vector.multi_reduction <add>, %23, %cst_18 [0] : vector<4x128xf32> to vector<128xf32>
    %25 = vector.shape_cast %24 : vector<128xf32> to vector<1x128xf32>
    %c0_19 = arith.constant 0 : index
    %c0_20 = arith.constant 0 : index
    %26 = vector.load %arg8[%c0_19, %c0_20] : memref<1x1xf32, #tpu.memory_space<vmem>>, vector<1x1xf32>
    %27 = vector.broadcast %26 : vector<1x1xf32> to vector<1x128xf32>
    %28 = arith.addf %25, %27 : vector<1x128xf32>
    %29 = math.absf %28 : vector<1x128xf32>
    %cst_21 = arith.constant 0.000000e+00 : f32
    %30 = vector.broadcast %cst_21 : f32 to vector<1x128xf32>
    %31 = arith.subf %30, %29 : vector<1x128xf32>
    %32 = math.exp %31 : vector<1x128xf32>
    %cst_22 = arith.constant 1.000000e+00 : f32
    %33 = vector.broadcast %cst_22 : f32 to vector<1x128xf32>
    %34 = arith.addf %33, %32 : vector<1x128xf32>
    %35 = tpu.reciprocal %34 {approx = true} : vector<1x128xf32> -> vector<1x128xf32>
    %cst_23 = arith.constant 0.000000e+00 : f32
    %36 = vector.broadcast %cst_23 : f32 to vector<1x128xf32>
    %37 = arith.cmpf oge, %28, %36 : vector<1x128xf32>
    %38 = arith.mulf %32, %35 : vector<1x128xf32>
    %39 = arith.select %37, %35, %38 : vector<1x128xi1>, vector<1x128xf32>
    %c0_24 = arith.constant 0 : index
    %c0_25 = arith.constant 0 : index
    %40 = vector.load %arg9[%c0_24, %c0_25] : memref<1x128xf32, #tpu.memory_space<vmem>>, vector<1x128xf32>
    tpu.vector_store %arg9[%c0_24, %c0_25], %39 {strides = array<i32>} : memref<1x128xf32, #tpu.memory_space<vmem>>, vector<1x128xf32>,
    return
  }
  func.func @transform_0(%arg0: i32) -> (i32, i32) {
    %c0_i32 = arith.constant 0 : i32
    %c0_i32_0 = arith.constant 0 : i32
    return %c0_i32, %arg0 : i32, i32
  }
  func.func @transform_1(%arg0: i32) -> (i32, i32) {
    %c0_i32 = arith.constant 0 : i32
    %c0_i32_0 = arith.constant 0 : i32
    %c0_i32_1 = arith.constant 0 : i32
    return %c0_i32, %c0_i32_0 : i32, i32
  }
  func.func @transform_2(%arg0: i32) -> (i32, i32) {
    %c0_i32 = arith.constant 0 : i32
    %c0_i32_0 = arith.constant 0 : i32
    %c0_i32_1 = arith.constant 0 : i32
    return %c0_i32, %c0_i32_0 : i32, i32
  }
  func.func @transform_3(%arg0: i32) -> (i32, i32) {
    %c0_i32 = arith.constant 0 : i32
    %c0_i32_0 = arith.constant 0 : i32
    %c0_i32_1 = arith.constant 0 : i32
    return %c0_i32, %c0_i32_0 : i32, i32
  }
  func.func @transform_4(%arg0: i32) -> (i32, i32) {
    %c0_i32 = arith.constant 0 : i32
    %c0_i32_0 = arith.constant 0 : i32
    %c0_i32_1 = arith.constant 0 : i32
    return %c0_i32, %c0_i32_0 : i32, i32
  }
  func.func @transform_5(%arg0: i32) -> (i32, i32) {
    %c0_i32 = arith.constant 0 : i32
    %c0_i32_0 = arith.constant 0 : i32
    %c0_i32_1 = arith.constant 0 : i32
    return %c0_i32, %c0_i32_0 : i32, i32
  }
  func.func @transform_6(%arg0: i32) -> (i32, i32) {
    %c0_i32 = arith.constant 0 : i32
    %c0_i32_0 = arith.constant 0 : i32
    %c0_i32_1 = arith.constant 0 : i32
    return %c0_i32, %c0_i32_0 : i32, i32
  }
  func.func @transform_7(%arg0: i32) -> (i32, i32) {
    %c0_i32 = arith.constant 0 : i32
    %c0_i32_0 = arith.constant 0 : i32
    %c0_i32_1 = arith.constant 0 : i32
    return %c0_i32, %c0_i32_0 : i32, i32
  }
  func.func @transform_8(%arg0: i32) -> (i32, i32) {
    %c0_i32 = arith.constant 0 : i32
    %c0_i32_0 = arith.constant 0 : i32
    return %c0_i32, %arg0 : i32, i32
  }
}

</mosaic_0001>

<llo_original>
// kernel: logistic_regression_forward.1
$region0: #{logistic_regression_forward.1}
  #allocation0 [shape = 'u32[]', space=smem, size = 0x4, offset = 0x4, fixed_abs, tag = 'smem constant byte address 0x4 - core index']
  #allocation1 [shape = 'u32[144,128]{1,0:T(1,128)}', space=vmem, size = 0x12000, scoped, tag = 'internal scratch']
  #allocation2 [shape = 'f32[1,1]{1,0:T(1,128)S(1)}', space=vmem, size = 0x200, scoped, tag = 'scoped memory for logistic_regression_forward.1']
  %s0 = inlined_call_operand.vmem [shape: bf16[4,128], index: 0, kind: input, shape index: {}]
  %s1 = inlined_call_operand.vmem [shape: bf16[64,4], index: 1, kind: input, shape index: {}]
  %s2 = inlined_call_operand.vmem [shape: bf16[16,64], index: 2, kind: input, shape index: {}]
  %s3 = inlined_call_operand.vmem [shape: f32[16,1], index: 3, kind: input, shape index: {}]
  %s4 = inlined_call_operand.vmem [shape: bf16[4,16], index: 4, kind: input, shape index: {}]
  %s5 = inlined_call_operand.vmem [shape: f32[4,1], index: 5, kind: input, shape index: {}]
  %s6 = inlined_call_operand.vmem [shape: f32[4,1], index: 6, kind: input, shape index: {}]
  %s7 = inlined_call_operand.<no memory space> [shape: f32[1,1], index: 7, kind: input, shape index: {}]
  %s8 = inlined_call_operand.vmem [shape: f32[1,128], index: 8, kind: output, shape index: {}]
  %s9 = sld [smem:[#allocation0]]
  $region42: #{logistic_regression_forward.1} parent=0
    _
  %s11 = ssub.s32 1, %s9
  %s12 = scalar_select 0, %s11, %s9
  %v13 = vstv %s7
  %14 = vst [vmem:[#allocation2] sm:$0x1] %v13
  // Predicated region
  $region2: #{logistic_regression_forward.1} parent=0 // pred_check
    _
  $region3: #{logistic_regression_forward.1} parent=0 // pred_check_branch
    %16 = sbr.rel (0) target = $region5
  $region4: #{logistic_regression_forward.1} parent=0 // pred_region
    _
  $region5: #{logistic_regression_forward.1} parent=0 // pred_fallthru
    _
  // Predicated region
  $region6: #{logistic_regression_forward.1} parent=0 // pred_check
    _
  $region7: #{logistic_regression_forward.1} parent=0 // pred_check_branch
    %18 = sbr.rel (0) target = $region9
  $region8: #{logistic_regression_forward.1} parent=0 // pred_region
    _
  $region9: #{logistic_regression_forward.1} parent=0 // pred_fallthru
    _
  // Predicated region
  $region10: #{logistic_regression_forward.1} parent=0 // pred_check
    _
  $region11: #{logistic_regression_forward.1} parent=0 // pred_check_branch
    %20 = sbr.rel (0) target = $region13
  $region12: #{logistic_regression_forward.1} parent=0 // pred_region
    _
  $region13: #{logistic_regression_forward.1} parent=0 // pred_fallthru
    _
  // Predicated region
  $region14: #{logistic_regression_forward.1} parent=0 // pred_check
    _
  $region15: #{logistic_regression_forward.1} parent=0 // pred_check_branch
    %22 = sbr.rel (0) target = $region17
  $region16: #{logistic_regression_forward.1} parent=0 // pred_region
    _
  $region17: #{logistic_regression_forward.1} parent=0 // pred_fallthru
    _
  // Predicated region
  $region18: #{logistic_regression_forward.1} parent=0 // pred_check
    _
  $region19: #{logistic_regression_forward.1} parent=0 // pred_check_branch
    %24 = sbr.rel (0) target = $region21
  $region20: #{logistic_regression_forward.1} parent=0 // pred_region
    _
  $region21: #{logistic_regression_forward.1} parent=0 // pred_fallthru
    _
  // Predicated region
  $region22: #{logistic_regression_forward.1} parent=0 // pred_check
    _
  $region23: #{logistic_regression_forward.1} parent=0 // pred_check_branch
    %26 = sbr.rel (0) target = $region25
  $region24: #{logistic_regression_forward.1} parent=0 // pred_region
    _
  $region25: #{logistic_regression_forward.1} parent=0 // pred_fallthru
    _
  // Predicated region
  $region26: #{logistic_regression_forward.1} parent=0 // pred_check
    _
  $region27: #{logistic_regression_forward.1} parent=0 // pred_check_branch
    %28 = sbr.rel (0) target = $region29
  $region28: #{logistic_regression_forward.1} parent=0 // pred_region
    _
  $region29: #{logistic_regression_forward.1} parent=0 // pred_fallthru
    _
  // Predicated region
  $region30: #{logistic_regression_forward.1} parent=0 // pred_check
    _
  $region31: #{logistic_regression_forward.1} parent=0 // pred_check_branch
    %30 = sbr.rel (0) target = $region33
  $region32: #{logistic_regression_forward.1} parent=0 // pred_region
    _
  $region33: #{logistic_regression_forward.1} parent=0 // pred_fallthru
    _
  %v32 = vld [vmem:[%s0] sm:$0x3]
  %v33 = vld [vmem:[%s1] sm:$0xf]
  %v34 = vld [vmem:[%s1 + $0x4] sm:$0xf]
  %v35 = vld [vmem:[%s1 + $0x8] sm:$0xf]
  %v36 = vld [vmem:[%s1 + $0xc] sm:$0xf]
  %v37 = vld [vmem:[%s1 + $0x10] sm:$0xf]
  %v38 = vld [vmem:[%s1 + $0x14] sm:$0xf]
  %v39 = vld [vmem:[%s1 + $0x18] sm:$0xf]
  %v40 = vld [vmem:[%s1 + $0x1c] sm:$0xf]
  %v49 = vunpack.c.l.b16 %v33
  %v50 = vunpack.c.l.b16 %v34
  %v51 = vunpack.c.l.b16 %v35
  %v52 = vunpack.c.l.b16 %v36
  %v53 = vunpack.c.l.b16 %v37
  %v54 = vunpack.c.l.b16 %v38
  %v55 = vunpack.c.l.b16 %v39
  %v56 = vunpack.c.l.b16 %v40
  %v57 = vpack.c.b16 %v50, %v49
  %v58 = vpack.c.b16 %v52, %v51
  %v59 = vpack.c.b16 %v54, %v53
  %v60 = vpack.c.b16 %v56, %v55
  %vm61 = vcmask 31744
  %v63 = vsel %vm61, %v57, 0
  %v66 = vsel %vm61, %v58, 0
  %v69 = vsel %vm61, %v59, 0
  %v72 = vsel %vm61, %v60, 0
  %vm74 = vcmask 1041408
  %v76 = vsel %vm74, %v32, 0
  %78 = vmatprep.subr.bf16.mxu0 0
  %79 = vmatpush1.bf16.msra.mxu0 0
  %80 = vmatprep.subr.bf16.mxu0 0
  %81 = vmatpush1.bf16.msra.mxu0 0
  %82 = vmatprep.subr.bf16.mxu0 0
  %83 = vmatpush1.bf16.msra.mxu0 0
  %84 = vmatprep.subr.bf16.mxu0 0
  %85 = vmatpush1.bf16.msra.mxu0 0
  %86 = vmatprep.subr.bf16.mxu0 0
  %87 = vmatpush1.bf16.msra.mxu0 0
  %88 = vmatprep.subr.bf16.mxu0 0
  %89 = vmatpush1.bf16.msra.mxu0 0
  %90 = vmatprep.subr.bf16.mxu0 0
  %91 = vmatpush1.bf16.msra.mxu0 0
  %92 = vmatprep.subr.bf16.mxu0 0
  %93 = vmatpush1.bf16.msra.mxu0 %v76
  %94 = vmatprep.subr.bf16.mxu0 0
  %95 = vmatpush2.bf16.msra.mxu0 0
  %96 = vmatprep.subr.bf16.mxu0 0
  %97 = vmatpush2.bf16.msra.mxu0 0
  %98 = vmatprep.subr.bf16.mxu0 0
  %99 = vmatpush2.bf16.msra.mxu0 0
  %100 = vmatprep.subr.bf16.mxu0 0
  %101 = vmatpush2.bf16.msra.mxu0 0
  %102 = vmatprep.subr.bf16.mxu0 0
  %103 = vmatpush2.bf16.msra.mxu0 0
  %104 = vmatprep.subr.bf16.mxu0 0
  %105 = vmatpush2.bf16.msra.mxu0 0
  %106 = vmatprep.subr.bf16.mxu0 0
  %107 = vmatpush2.bf16.msra.mxu0 0
  %108 = vmatprep.subr.bf16.mxu0 0
  %109 = vmatpush2.bf16.msra.mxu0 0
  %110 = vmatprep.mubr.bf16.mxu0 0
  %111 = vmatmul.mubr.bf16.gmra.mxu0 %v63
  %v112 = vpop.f32.mrf.mxu0
  %v113 = vadd.f32 0.0, %v112
  %v114 = vpop.f32.mrf.mxu0
  %v115 = vpop.f32.mrf.mxu0
  %v116 = vadd.f32 0.0, %v115
  %v117 = vpop.f32.mrf.mxu0
  %118 = vmatprep.mubr.bf16.mxu0 0
  %119 = vmatmul.mubr.bf16.gmra.mxu0 %v66
  %v120 = vpop.f32.mrf.mxu0
  %v121 = vadd.f32 0.0, %v120
  %v122 = vpop.f32.mrf.mxu0
  %v123 = vpop.f32.mrf.mxu0
  %v124 = vadd.f32 0.0, %v123
  %v125 = vpop.f32.mrf.mxu0
  %126 = vmatprep.mubr.bf16.mxu0 0
  %127 = vmatmul.mubr.bf16.gmra.mxu0 %v69
  %v128 = vpop.f32.mrf.mxu0
  %v129 = vadd.f32 0.0, %v128
  %v130 = vpop.f32.mrf.mxu0
  %v131 = vpop.f32.mrf.mxu0
  %v132 = vadd.f32 0.0, %v131
  %v133 = vpop.f32.mrf.mxu0
  %134 = vmatprep.mubr.bf16.mxu0 0
  %135 = vmatmul.mubr.bf16.gmra.mxu0 %v72
  %v136 = vpop.f32.mrf.mxu0
  %v137 = vadd.f32 0.0, %v136
  %v138 = vpop.f32.mrf.mxu0
  %v139 = vpop.f32.mrf.mxu0
  %v140 = vadd.f32 0.0, %v139
  %v141 = vpop.f32.mrf.mxu0
  %142 = vdwg.mxu0
  %v143 = vmax.f32 %v113, 0.0
  %v144 = vmax.f32 %v116, 0.0
  %v145 = vmax.f32 %v121, 0.0
  %v146 = vmax.f32 %v124, 0.0
  %v147 = vmax.f32 %v129, 0.0
  %v148 = vmax.f32 %v132, 0.0
  %v149 = vmax.f32 %v137, 0.0
  %v150 = vmax.f32 %v140, 0.0
  %v151 = vld [vmem:[%s2] sm:$0xf]
  %v152 = vld [vmem:[%s2 + $0x4] sm:$0xf]
  %v153 = vpack.c.bf16 %v144, %v143
  %v154 = vpack.c.bf16 %v146, %v145
  %v155 = vpack.c.bf16 %v148, %v147
  %v156 = vpack.c.bf16 %v150, %v149
  %v157 = vld [vmem:[%s3] sm:$0xff]
  %v158 = vld [vmem:[%s3 + $0x8] sm:$0xff]
  %160 = vset.pattern.permute.xlu0 0
  %161 = vperm.xlu0 %160, %v157
  %v162 = vpop.permute.xlu0 %161
  %165 = vset.pattern.permute.xlu0 0
  %166 = vperm.xlu0 %165, %v158
  %v167 = vpop.permute.xlu0 %166
  %v171 = vunpack.c.l.b16 %v151
  %v172 = vunpack.c.l.b16 %v152
  %v173 = vpack.c.b16 %v172, %v171
  %vm174 = vcmask 523264
  %v176 = vsel %vm174, %v173, 0
  %178 = vmatprep.subr.bf16.mxu0 0
  %179 = vmatpush1.bf16.msra.mxu0 0
  %180 = vmatprep.subr.bf16.mxu0 0
  %181 = vmatpush1.bf16.msra.mxu0 0
  %182 = vmatprep.subr.bf16.mxu0 0
  %183 = vmatpush1.bf16.msra.mxu0 0
  %184 = vmatprep.subr.bf16.mxu0 0
  %185 = vmatpush1.bf16.msra.mxu0 0
  %186 = vmatprep.subr.bf16.mxu0 0
  %187 = vmatpush1.bf16.msra.mxu0 %v156
  %188 = vmatprep.subr.bf16.mxu0 0
  %189 = vmatpush1.bf16.msra.mxu0 %v155
  %190 = vmatprep.subr.bf16.mxu0 0
  %191 = vmatpush1.bf16.msra.mxu0 %v154
  %192 = vmatprep.subr.bf16.mxu0 0
  %193 = vmatpush1.bf16.msra.mxu0 %v153
  %194 = vmatprep.subr.bf16.mxu0 0
  %195 = vmatpush2.bf16.msra.mxu0 0
  %196 = vmatprep.subr.bf16.mxu0 0
  %197 = vmatpush2.bf16.msra.mxu0 0
  %198 = vmatprep.subr.bf16.mxu0 0
  %199 = vmatpush2.bf16.msra.mxu0 0
  %200 = vmatprep.subr.bf16.mxu0 0
  %201 = vmatpush2.bf16.msra.mxu0 0
  %202 = vmatprep.subr.bf16.mxu0 0
  %203 = vmatpush2.bf16.msra.mxu0 0
  %204 = vmatprep.subr.bf16.mxu0 0
  %205 = vmatpush2.bf16.msra.mxu0 0
  %206 = vmatprep.subr.bf16.mxu0 0
  %207 = vmatpush2.bf16.msra.mxu0 0
  %208 = vmatprep.subr.bf16.mxu0 0
  %209 = vmatpush2.bf16.msra.mxu0 0
  %210 = vmatprep.mubr.bf16.mxu0 0
  %211 = vmatmul.mubr.bf16.gmra.mxu0 %v176
  %v212 = vpop.f32.mrf.mxu0
  %v213 = vadd.f32 %v162, %v212
  %v214 = vpop.f32.mrf.mxu0
  %v215 = vpop.f32.mrf.mxu0
  %v216 = vadd.f32 %v167, %v215
  %v217 = vpop.f32.mrf.mxu0
  %218 = vdwg.mxu0
  %v219 = vmax.f32 %v213, 0.0
  %v220 = vmax.f32 %v216, 0.0
  %v221 = vld [vmem:[%s4] sm:$0x3]
  %v222 = vpack.c.bf16 %v220, %v219
  %v223 = vld [vmem:[%s5] sm:$0xf]
  %225 = vset.pattern.permute.xlu0 0
  %226 = vperm.xlu0 %225, %v223
  %v227 = vpop.permute.xlu0 %226
  %vm229 = vcmask 130048
  %v231 = vsel %vm229, %v221, 0
  %233 = vmatprep.subr.bf16.mxu0 0
  %234 = vmatpush1.bf16.msra.mxu0 0
  %235 = vmatprep.subr.bf16.mxu0 0
  %236 = vmatpush1.bf16.msra.mxu0 0
  %237 = vmatprep.subr.bf16.mxu0 0
  %238 = vmatpush1.bf16.msra.mxu0 0
  %239 = vmatprep.subr.bf16.mxu0 0
  %240 = vmatpush1.bf16.msra.mxu0 0
  %241 = vmatprep.subr.bf16.mxu0 0
  %242 = vmatpush1.bf16.msra.mxu0 0
  %243 = vmatprep.subr.bf16.mxu0 0
  %244 = vmatpush1.bf16.msra.mxu0 0
  %245 = vmatprep.subr.bf16.mxu0 0
  %246 = vmatpush1.bf16.msra.mxu0 0
  %247 = vmatprep.subr.bf16.mxu0 0
  %248 = vmatpush1.bf16.msra.mxu0 %v222
  %249 = vmatprep.subr.bf16.mxu0 0
  %250 = vmatpush2.bf16.msra.mxu0 0
  %251 = vmatprep.subr.bf16.mxu0 0
  %252 = vmatpush2.bf16.msra.mxu0 0
  %253 = vmatprep.subr.bf16.mxu0 0
  %254 = vmatpush2.bf16.msra.mxu0 0
  %255 = vmatprep.subr.bf16.mxu0 0
  %256 = vmatpush2.bf16.msra.mxu0 0
  %257 = vmatprep.subr.bf16.mxu0 0
  %258 = vmatpush2.bf16.msra.mxu0 0
  %259 = vmatprep.subr.bf16.mxu0 0
  %260 = vmatpush2.bf16.msra.mxu0 0
  %261 = vmatprep.subr.bf16.mxu0 0
  %262 = vmatpush2.bf16.msra.mxu0 0
  %263 = vmatprep.subr.bf16.mxu0 0
  %264 = vmatpush2.bf16.msra.mxu0 0
  %265 = vmatprep.mubr.bf16.mxu0 0
  %266 = vmatmul.mubr.bf16.gmra.mxu0 %v231
  %v267 = vpop.f32.mrf.mxu0
  %v268 = vadd.f32 %v227, %v267
  %v269 = vpop.f32.mrf.mxu0
  %v270 = vpop.f32.mrf.mxu0
  %v271 = vpop.f32.mrf.mxu0
  %272 = vdwg.mxu0
  %v273 = vmax.f32 %v268, 0.0
  %v274 = vld [vmem:[%s6] sm:$0xf]
  %276 = vset.pattern.permute.xlu0 0
  %277 = vperm.xlu0 %276, %v274
  %v278 = vpop.permute.xlu0 %277
  %v280 = vmul.f32 %v273, %v278
  %vm281 = vcmask 1043456
  %v282 = vsel %vm281, %v280, 0.0
  %v283 = vrot.slane %v282, 4
  %v284 = vadd.f32 %v282, %v283
  %v285 = vrot.slane %v284, 2
  %v286 = vadd.f32 %v284, %v285
  %v287 = vrot.slane %v286, 1
  %v288 = vadd.f32 %v286, %v287
  %v289 = vld [vmem:[#allocation2] sm:$0x1]
  %291 = vset.pattern.permute.xlu0 0
  %292 = vperm.xlu0 %291, %v289
  %v293 = vpop.permute.xlu0 %292
  %v295 = vlaneseq
  %v296 = vshrl.u32 %v295, 7
  %v297 = vsub.s32 0, %v296
  %v298 = vrot.slane %v293, %v297
  %v299 = vadd.f32 %v288, %v298
  %v300 = vand.u32 2147483647, %v299
  %v301 = vsub.f32 0.0, %v300
  %v302 = vmul.f32 %v301, 1.442695
  %v303 = vpow.pop %v302
  %v304 = vadd.f32 %v303, 1.0
  %v305 = vrcp.pop %v304
  %vm306 = vcmp.ge.f32.partialorder %v299, 0.0
  %v307 = vmul.f32 %v303, %v305
  %v308 = vsel %vm306, %v305, %v307
  %309 = vst [vmem:[%s8] sm:$0x1] %v308
  // Predicated region
  $region34: #{logistic_regression_forward.1} parent=0 // pred_check
    _
  $region35: #{logistic_regression_forward.1} parent=0 // pred_check_branch
    %311 = sbr.rel (0) target = $region37
  $region36: #{logistic_regression_forward.1} parent=0 // pred_region
    _
  $region37: #{logistic_regression_forward.1} parent=0 // pred_fallthru
    _
  // Predicated region
  $region38: #{logistic_regression_forward.1} parent=0 // pred_check
    _
  $region39: #{logistic_regression_forward.1} parent=0 // pred_check_branch
    %313 = sbr.rel (0) target = $region41
  $region40: #{logistic_regression_forward.1} parent=0 // pred_region
    _
  $region41: #{logistic_regression_forward.1} parent=0 // pred_fallthru
    _

</llo_original>
